<compile_context>
chip_gen: v7x
topology: tpu7x:2x2x1
jax: 0.10.0
libtpu: 0.0.40
codegen_flags: <defaults>
</compile_context>

<pallas_src>
import functools
import math

import jax
import jax.numpy as jnp
from jax import lax
from jax.experimental import pallas as pl
from jax.experimental.pallas import tpu as pltpu


def _mix_u32(x):
    """splitmix32-style 32-bit finalizer (pure integer VPU ops, good avalanche)."""
    x = x ^ (x >> jnp.uint32(16))
    x = x * jnp.uint32(0x7FEB352D)
    x = x ^ (x >> jnp.uint32(15))
    x = x * jnp.uint32(0x846CA68B)
    x = x ^ (x >> jnp.uint32(16))
    return x


def _posenc_kernel(seed_ref, x_ref, pe_ref, o_ref, *, tile_s, p, train):
    # seed_ref: (1,) int32 in SMEM (scalar prefetch)
    # x_ref   : (TILE_S, B, D)   pe_ref : (TILE_S, D)   o_ref : (TILE_S, B, D)
    x = x_ref[...]
    pe = pe_ref[...].astype(x.dtype)
    y = x + pe[:, None, :]                       # broadcast add over the batch axis

    if train and p > 0.0:
        # Inverted dropout, same semantics as nn.Dropout(p) in train mode.
        # TODO(synk): PyTorch's exact RNG stream cannot be reproduced; a deterministic
        # counter-based hash keyed on (runtime seed, global element index) is used.
        ts, b, d = x_ref.shape
        row0 = (pl.program_id(0) * tile_s).astype(jnp.uint32)
        s_idx = lax.broadcasted_iota(jnp.uint32, (ts, b, d), 0) + row0
        b_idx = lax.broadcasted_iota(jnp.uint32, (ts, b, d), 1)
        d_idx = lax.broadcasted_iota(jnp.uint32, (ts, b, d), 2)
        ctr = (s_idx * jnp.uint32(b) + b_idx) * jnp.uint32(d) + d_idx
        seed = _mix_u32(seed_ref[0].astype(jnp.uint32) ^ jnp.uint32(0x9E3779B9))
        bits = _mix_u32(ctr ^ seed)
        # Integer-domain threshold: P(keep) = 1 - p; no shift/float-convert chain.
        thr = jnp.uint32(min(int(round(p * 2.0 ** 32)), 2 ** 32 - 1))
        keep = bits >= thr
        scale = jnp.asarray(1.0 / (1.0 - p), dtype=y.dtype)
        y = jnp.where(keep, y * scale, jnp.zeros_like(y))

    o_ref[...] = y


def make_pe_table(d_model, max_len=5000, dtype=jnp.float32):
    """Deterministic sinusoidal table, same math as the PyTorch __init__."""
    position = jnp.arange(max_len, dtype=jnp.float32)[:, None]            # (L, 1)
    div_term = jnp.exp(
        jnp.arange(0, d_model, 2, dtype=jnp.float32) * (-math.log(10000.0) / d_model)
    )                                                                     # (D/2,)
    ang = position * div_term                                             # (L, D/2)
    pe = jnp.zeros((max_len, d_model), dtype=jnp.float32)
    pe = pe.at[:, 0::2].set(jnp.sin(ang))
    pe = pe.at[:, 1::2].set(jnp.cos(ang))
    return pe.astype(dtype)


def _choose_tile_s(S, B, D, itemsize, target_bytes=2 << 20):
    """Pick an S-tile so one x block is ~2 MiB (double-buffered in/out stays well
    under the v5e 16 MiB / v7x 32 MiB scoped-VMEM defaults)."""
    rows = target_bytes // max(1, B * D * itemsize)
    if rows >= S:
        return S
    return min(S, max(8, (rows // 8) * 8))       # keep the pe-block sublane dim %8==0


@functools.partial(jax.jit, static_argnames=("p", "train"))
def positional_encoding(x, pe_table, seed, *, p=0.1, train=False):
    """x: (seq_len, batch, d_model). Returns x + pe[:seq_len] (+ inverted dropout if train)."""
    S, B, D = x.shape
    pe = pe_table[:S].astype(x.dtype)            # read pe in the compute dtype
    tile_s = _choose_tile_s(S, B, D, x.dtype.itemsize)
    seed_arr = jnp.asarray(seed, dtype=jnp.int32).reshape((1,))

    kernel = functools.partial(
        _posenc_kernel, tile_s=tile_s, p=float(p), train=bool(train)
    )

    # NOTE: for best store efficiency D should be a multiple of 128 (lane-dense
    # output); small demo D is still correct, just uses masked partial stores.
    return pl.pallas_call(
        kernel,
        out_shape=jax.ShapeDtypeStruct((S, B, D), x.dtype),
        grid_spec=pltpu.PrefetchScalarGridSpec(
            num_scalar_prefetch=1,
            grid=(pl.cdiv(S, tile_s),),
            in_specs=[
                pl.BlockSpec((tile_s, B, D), lambda i, seed_ref: (i, 0, 0)),
                pl.BlockSpec((tile_s, D), lambda i, seed_ref: (i, 0)),
            ],
            out_specs=pl.BlockSpec((tile_s, B, D), lambda i, seed_ref: (i, 0, 0)),
        ),
        compiler_params=pltpu.CompilerParams(
            dimension_semantics=("parallel",),      # shard S-tiles across v7x's 2 TCs
            vmem_limit_bytes=32 * 1024 * 1024,      # headroom below v7x's 64 MiB VMEM
        ),
    )(seed_arr, x, pe)


if __name__ == "__main__":
    # Small shapes consistent with the module's (seq, batch, d_model) convention.
    S, B, D = 8, 2, 32
    key = jax.random.PRNGKey(0)
    x = jax.random.normal(key, (S, B, D), dtype=jnp.float32)

    pe_table = make_pe_table(D, max_len=5000, dtype=x.dtype)
    ref = x + pe_table[:S][:, None, :]

    # Eval mode (dropout is identity) — deterministic, check against reference.
    out = jax.block_until_ready(positional_encoding(x, pe_table, 0, p=0.1, train=False))
    assert out.shape == (S, B, D)
    assert jnp.allclose(out, ref, atol=1e-5, rtol=1e-5), "mismatch vs reference"

    # Train mode: every element must be either 0 (dropped) or ref/(1-p) (kept, scaled).
    p = 0.1
    out_tr = jax.block_until_ready(positional_encoding(x, pe_table, 1234, p=p, train=True))
    scaled = ref / (1.0 - p)
    ok = jnp.isclose(out_tr, scaled, atol=1e-5, rtol=1e-5) | (jnp.abs(out_tr) < 1e-7)
    assert bool(jnp.all(ok)), "train-mode output is not {0, scaled} valued"

    # Changing the seed changes the mask without recompiling (seed is runtime data).
    out_tr2 = jax.block_until_ready(positional_encoding(x, pe_table, 99, p=p, train=True))
    assert not bool(jnp.array_equal(out_tr, out_tr2)), "dropout mask ignored the seed"

    print("KERNEL_OK")
</pallas_src>

<mosaic_0001>
module attributes {stable_mosaic.version = 11 : i64} {
  func.func @_posenc_kernel(%arg0: i32, %arg1: memref<1xi32, #tpu.memory_space<smem>>, %arg2: memref<8x2x32xf32, #tpu.memory_space<vmem>>, %arg3: memref<8x32xf32, #tpu.memory_space<vmem>>, %arg4: memref<8x2x32xf32, #tpu.memory_space<vmem>>) attributes {dimension_semantics = [#tpu.dimension_semantics<parallel>], iteration_bounds = array<i64: 1>, scalar_prefetch = 1 : i64, scratch_operands = 0 : i64, tpu.core_type = #tpu.core_type<tc>, window_params = [{transform_indices = @transform_0, window_bounds = array<i64: 8, 2, 32>}, {transform_indices = @transform_1, window_bounds = array<i64: 8, 32>}, {transform_indices = @transform_2, window_bounds = array<i64: 8, 2, 32>}]} {
    %c0 = arith.constant 0 : index
    %c0_0 = arith.constant 0 : index
    %c0_1 = arith.constant 0 : index
    %0 = vector.load %arg2[%c0, %c0_0, %c0_1] : memref<8x2x32xf32, #tpu.memory_space<vmem>>, vector<8x2x32xf32>
    %c0_2 = arith.constant 0 : index
    %c0_3 = arith.constant 0 : index
    %1 = vector.load %arg3[%c0_2, %c0_3] : memref<8x32xf32, #tpu.memory_space<vmem>>, vector<8x32xf32>
    %2 = vector.shape_cast %1 : vector<8x32xf32> to vector<8x1x32xf32>
    %3 = vector.broadcast %2 : vector<8x1x32xf32> to vector<8x2x32xf32>
    %4 = arith.addf %0, %3 : vector<8x2x32xf32>
    %c0_4 = arith.constant 0 : index
    %c0_5 = arith.constant 0 : index
    %c0_6 = arith.constant 0 : index
    %5 = vector.load %arg4[%c0_4, %c0_5, %c0_6] : memref<8x2x32xf32, #tpu.memory_space<vmem>>, vector<8x2x32xf32>
    tpu.vector_store %arg4[%c0_4, %c0_5, %c0_6], %4 {strides = array<i32>} : memref<8x2x32xf32, #tpu.memory_space<vmem>>, vector<8x2x32xf32>,
    return
  }
  func.func @transform_0(%arg0: i32, %arg1: memref<1xi32, #tpu.memory_space<smem>>) -> (i32, i32, i32) {
    %c0_i32 = arith.constant 0 : i32
    %c0_i32_0 = arith.constant 0 : i32
    %c0_i32_1 = arith.constant 0 : i32
    return %arg0, %c0_i32, %c0_i32_0 : i32, i32, i32
  }
  func.func @transform_1(%arg0: i32, %arg1: memref<1xi32, #tpu.memory_space<smem>>) -> (i32, i32) {
    %c0_i32 = arith.constant 0 : i32
    %c0_i32_0 = arith.constant 0 : i32
    return %arg0, %c0_i32 : i32, i32
  }
  func.func @transform_2(%arg0: i32, %arg1: memref<1xi32, #tpu.memory_space<smem>>) -> (i32, i32, i32) {
    %c0_i32 = arith.constant 0 : i32
    %c0_i32_0 = arith.constant 0 : i32
    %c0_i32_1 = arith.constant 0 : i32
    return %arg0, %c0_i32, %c0_i32_0 : i32, i32, i32
  }
}

</mosaic_0001>

<llo_original>
// kernel: positional_encoding.1
$region0: #{positional_encoding.1}
  #allocation0 [shape = 'u32[]', space=smem, size = 0x4, offset = 0x4, fixed_abs, tag = 'smem constant byte address 0x4 - core index']
  #allocation1 [shape = 'u32[144,128]{1,0:T(1,128)}', space=vmem, size = 0x12000, scoped, tag = 'internal scratch']
  #allocation2 [shape = 's32[1]{0}', space=sflag, size = 0x4, scoped, tag = 'scoped memory for positional_encoding.1']
  #allocation3 [shape = 's32[1]{0:T(128)S(6)}', space=smem, size = 0x200, scoped, tag = 'prefetched SMEM operand 0']
  %s0 = inlined_call_operand.<no memory space> [shape: s32[1], index: 0, kind: input, shape index: {}]
  %s1 = inlined_call_operand.vmem [shape: f32[8,2,32], index: 1, kind: input, shape index: {}]
  %s2 = inlined_call_operand.vmem [shape: f32[8,32], index: 2, kind: input, shape index: {}]
  %s3 = inlined_call_operand.hbm [shape: f32[8,2,32], index: 3, kind: output, shape index: {}]
  %s4 = sld [smem:[#allocation0]]
  $region18: #{positional_encoding.1} parent=0
    _
  %s6 = ssub.s32 1, %s4
  %s7 = scalar_select 0, %s6, %s4
  %8 = sst [smem:[#allocation3]] %s0
  $region1: #{positional_encoding.1} parent=0
    #allocation4 [shape = 'u8[8192]{0}', space=vmem, size = 0x2000, scoped, tag = 'output window, operand 0, single buffered']
    #allocation5 [shape = 's32[1]{0}', space=sflag, size = 0x4, scoped, tag = 'scoped memory for positional_encoding.1']
    %9 = vsyncpa [#allocation5], 0
    // Predicated region
    $region2: #{positional_encoding.1} parent=1 // pred_check
      _
    $region3: #{positional_encoding.1} parent=1 // pred_check_branch
      %11 = sbr.rel (0) target = $region5
    $region4: #{positional_encoding.1} parent=1 // pred_region
      _
    $region5: #{positional_encoding.1} parent=1 // pred_fallthru
      _
    // Predicated region
    $region6: #{positional_encoding.1} parent=1 // pred_check
      _
    $region7: #{positional_encoding.1} parent=1 // pred_check_branch
      %13 = sbr.rel (0) target = $region9
    $region8: #{positional_encoding.1} parent=1 // pred_region
      _
    $region9: #{positional_encoding.1} parent=1 // pred_fallthru
      _
    %v14 = vld [vmem:[%s1] sm:$0x3]
    %v15 = vld [vmem:[%s1 + $0x2] sm:$0x3]
    %v16 = vld [vmem:[%s1 + $0x4] sm:$0x3]
    %v17 = vld [vmem:[%s1 + $0x6] sm:$0x3]
    %v18 = vld [vmem:[%s1 + $0x8] sm:$0x3]
    %v19 = vld [vmem:[%s1 + $0xa] sm:$0x3]
    %v20 = vld [vmem:[%s1 + $0xc] sm:$0x3]
    %v21 = vld [vmem:[%s1 + $0xe] sm:$0x3]
    %v22 = vld [vmem:[%s2] sm:$0xff]
    %v24 = vcombine.high %v22, %v22
    %v26 = vunpack.c.l.s4 1966171168
    %v27 = vunpack.c.0.s8 %v26
    %v28 = vlaneseq
    %v29 = vshrl.u32 %v28, 7
    %v30 = vsub.s32 %v27, %v29
    %v31 = vrot.slane %v22, %v30
    %v33 = vunpack.c.l.s4 1966171168
    %v34 = vunpack.c.0.s8 %v33
    %v35 = vlaneseq
    %v36 = vshrl.u32 %v35, 7
    %v37 = vsub.s32 %v34, %v36
    %v38 = vrot.slane %v24, %v37
    %v39 = vcombine.high %v31, %v31
    %v40 = vcombine.high %v38, %v38
    %v42 = vunpack.c.l.s4 1966171168
    %v43 = vunpack.c.0.s8 %v42
    %v44 = vlaneseq
    %v45 = vshrl.u32 %v44, 7
    %v46 = vsub.s32 %v43, %v45
    %v47 = vrot.slane %v31, %v46
    %v49 = vunpack.c.l.s4 1966171168
    %v50 = vunpack.c.0.s8 %v49
    %v51 = vlaneseq
    %v52 = vshrl.u32 %v51, 7
    %v53 = vsub.s32 %v50, %v52
    %v54 = vrot.slane %v38, %v53
    %v56 = vunpack.c.l.s4 1966171168
    %v57 = vunpack.c.0.s8 %v56
    %v58 = vlaneseq
    %v59 = vshrl.u32 %v58, 7
    %v60 = vsub.s32 %v57, %v59
    %v61 = vrot.slane %v39, %v60
    %v63 = vunpack.c.l.s4 1966171168
    %v64 = vunpack.c.0.s8 %v63
    %v65 = vlaneseq
    %v66 = vshrl.u32 %v65, 7
    %v67 = vsub.s32 %v64, %v66
    %v68 = vrot.slane %v40, %v67
    %v69 = vcombine.high %v47, %v47
    %v70 = vcombine.high %v54, %v54
    %v71 = vcombine.high %v61, %v61
    %v72 = vcombine.high %v68, %v68
    %v73 = vlaneseq
    %v74 = vshrl.u32 %v73, 7
    %v75 = vsub.s32 0, %v74
    %v76 = vrot.slane %v47, %v75
    %v77 = vlaneseq
    %v78 = vshrl.u32 %v77, 7
    %v79 = vsub.s32 0, %v78
    %v80 = vrot.slane %v61, %v79
    %v81 = vlaneseq
    %v82 = vshrl.u32 %v81, 7
    %v83 = vsub.s32 0, %v82
    %v84 = vrot.slane %v69, %v83
    %v85 = vlaneseq
    %v86 = vshrl.u32 %v85, 7
    %v87 = vsub.s32 0, %v86
    %v88 = vrot.slane %v71, %v87
    %v89 = vlaneseq
    %v90 = vshrl.u32 %v89, 7
    %v91 = vsub.s32 0, %v90
    %v92 = vrot.slane %v54, %v91
    %v93 = vlaneseq
    %v94 = vshrl.u32 %v93, 7
    %v95 = vsub.s32 0, %v94
    %v96 = vrot.slane %v68, %v95
    %v97 = vlaneseq
    %v98 = vshrl.u32 %v97, 7
    %v99 = vsub.s32 0, %v98
    %v100 = vrot.slane %v70, %v99
    %v101 = vlaneseq
    %v102 = vshrl.u32 %v101, 7
    %v103 = vsub.s32 0, %v102
    %v104 = vrot.slane %v72, %v103
    %v113 = vadd.f32 %v14, %v76
    %v114 = vadd.f32 %v15, %v80
    %v115 = vadd.f32 %v16, %v84
    %v116 = vadd.f32 %v17, %v88
    %v117 = vadd.f32 %v18, %v92
    %v118 = vadd.f32 %v19, %v96
    %v119 = vadd.f32 %v20, %v100
    %v120 = vadd.f32 %v21, %v104
    %vm121 = vcmask 254976
    %122 = vst.msk [vmem:[#allocation4] sm:$0x3] %vm121, %v113
    %123 = vst.msk [vmem:[#allocation4 + $0x2] sm:$0x3] %vm121, %v114
    %124 = vst.msk [vmem:[#allocation4 + $0x4] sm:$0x3] %vm121, %v115
    %125 = vst.msk [vmem:[#allocation4 + $0x6] sm:$0x3] %vm121, %v116
    %126 = vst.msk [vmem:[#allocation4 + $0x8] sm:$0x3] %vm121, %v117
    %127 = vst.msk [vmem:[#allocation4 + $0xa] sm:$0x3] %vm121, %v118
    %128 = vst.msk [vmem:[#allocation4 + $0xc] sm:$0x3] %vm121, %v119
    %129 = vst.msk [vmem:[#allocation4 + $0xe] sm:$0x3] %vm121, %v120
    // Predicated region
    $region10: #{positional_encoding.1} parent=1 // pred_check
      _
    $region11: #{positional_encoding.1} parent=1 // pred_check_branch
      %131 = sbr.rel (0) target = $region13
    $region12: #{positional_encoding.1} parent=1 // pred_region
      %s133 = ssub.s32 256, 256
      %134 = vsyncadd [#allocation5], %s133
      %s135 = sshll.u32 [#allocation4], 4
      %s136 = int_to_ptr.vmem [resolvable:$true] %s135
      %141 = dma.vmem_to_hbm [thread:$0]  %s136, 256, %s3, [#allocation5], 32, 32, 2
    $region13: #{positional_encoding.1} parent=1 // pred_fallthru
      _
    // Predicated region
    $region14: #{positional_encoding.1} parent=1 // pred_check
      _
    $region15: #{positional_encoding.1} parent=1 // pred_check_branch
      %143 = sbr.rel (0) target = $region17
    $region16: #{positional_encoding.1} parent=1 // pred_region
      %144 = dma.done [#allocation5], 256
    $region17: #{positional_encoding.1} parent=1 // pred_fallthru
      _
    %145 = vsyncpa [#allocation5], 1

</llo_original>
